<compile_context>
chip_gen: v7x
topology: tpu7x:2x2x1
jax: 0.10.0
libtpu: 0.0.40
codegen_flags: <defaults>
</compile_context>

<pallas_src>
import functools

import jax
import jax.numpy as jnp
from jax.experimental import pallas as pl
from jax.experimental.pallas import tpu as pltpu


def _round_up(x, m):
    return ((x + m - 1) // m) * m


def _physical_vmem_bytes():
    """Per-TensorCore VMEM capacity; conservative fallback if unknown."""
    try:
        info = pltpu.get_tpu_info()
        v = getattr(info, "vmem_capacity_bytes", None)
        if v:
            return int(v)
    except Exception:
        pass
    return 64 << 20  # v7x per-TC size — the tightest modern value


def _vmem_limit_bytes():
    phys = _physical_vmem_bytes()
    # Raise the scoped-VMEM limit above the 16/32 MiB defaults but keep clear
    # headroom below physical capacity (v7x only has 64 MiB per TC).
    return int(max(32 << 20, min(phys - (16 << 20), 64 << 20)))


def _choose_tile_n(n, c, d, logits_dtype, feats_dtype, budget_bytes):
    """Rows per block, sized by actual (lane/sublane-padded) VMEM bytes."""
    lit = jnp.dtype(logits_dtype).itemsize
    fit = jnp.dtype(feats_dtype).itemsize
    # Sublane pack: 8 rows for 32-bit, 16 for bf16, 32 for int8.
    align = max(8, 32 // lit, 32 // fit)
    c_pad = _round_up(c, 128)
    d_pad = _round_up(d, 128)

    # Double-buffered streaming inputs, per row (VMEM lane-padded widths).
    db_row = c_pad * lit + d_pad * fit + 128 * 4        # logits + feats + target
    # Single-buffered per-row extras: f32 upcast copies (if inputs are narrow),
    # [T,C] compute temporaries (exp / masked logits), [T,1] accumulator.
    extra_row = 0
    if lit < 4:
        extra_row += c_pad * 4
    if fit < 4:
        extra_row += d_pad * 4
    extra_row += 2 * c_pad * 4 + 128 * 4

    tile = budget_bytes // max(2 * db_row + extra_row, 1)
    tile = max(align, min(tile, 1 << 15))
    tile = min(tile, _round_up(n, align))               # don't over-tile tiny batches
    return max(align, (tile // align) * align)


def _per_sample_loss(logits, feats, tgt, alpha, xi):
    """Per-row Objectosphere loss for one tile. Returns [T, 1] f32."""
    logits = logits.astype(jnp.float32)                  # [T, C]
    feats = feats.astype(jnp.float32)                    # [T, D]
    t, c = logits.shape

    # Stable log-sum-exp; log_probs never materialized.
    m = jnp.max(logits, axis=1, keepdims=True)                           # [T, 1]
    lse = jnp.log(jnp.sum(jnp.exp(logits - m), axis=1, keepdims=True)) + m

    class_ids = jax.lax.broadcasted_iota(jnp.int32, (t, c), 1)
    logit_at_tgt = jnp.sum(jnp.where(class_ids == tgt, logits, 0.0),
                           axis=1, keepdims=True)                        # [T, 1]
    mean_logits = jnp.sum(logits, axis=1, keepdims=True) * (1.0 / c)     # [T, 1]

    known = tgt >= 0                                                     # [T, 1]
    # CE(known)    = lse - logit[target]
    # -mean(log_p) = lse - mean(logits)
    entropic = jnp.where(known, lse - logit_at_tgt, lse - mean_logits)

    norm_sq = jnp.sum(feats * feats, axis=1, keepdims=True)              # [T, 1]
    norm = jnp.sqrt(norm_sq)
    reg = jnp.where(known, jnp.square(jnp.maximum(xi - norm, 0.0)), norm_sq)

    return entropic + alpha * reg                                        # [T, 1]


def _objectosphere_fused_kernel(logits_ref, feats_ref, target_ref, out_ref, acc_ref,
                                *, alpha, xi, n_total, tile_n, blocks_per_core):
    """Per-core partial sum of loss_i; writes one (8,128) block per core."""
    ci = pl.program_id(0)        # core split (parallel)
    bi = pl.program_id(1)        # per-core streaming steps (reduction)

    @pl.when(bi == 0)
    def _():
        acc_ref[...] = jnp.zeros_like(acc_ref)

    per_sample = _per_sample_loss(logits_ref[...], feats_ref[...], target_ref[...],
                                  alpha, xi)                             # [T, 1]

    # Mask rows past the true batch size (covers the padded edge block and the
    # phantom clamped blocks of the second core). Select, not multiply, so
    # inf/NaN from garbage rows cannot propagate.
    t = per_sample.shape[0]
    logical_block = ci * blocks_per_core + bi
    row_ids = logical_block * tile_n + jax.lax.broadcasted_iota(jnp.int32, (t, 1), 0)
    per_sample = jnp.where(row_ids < n_total, per_sample, 0.0)

    acc_ref[...] += per_sample                                           # [T, 1] running sum

    @pl.when(bi == pl.num_programs(1) - 1)
    def _():
        total = jnp.sum(acc_ref[...], axis=0, keepdims=True)             # (1, 1)
        out_ref[...] = jnp.broadcast_to(total, out_ref.shape).astype(out_ref.dtype)


def _objectosphere_persample_kernel(logits_ref, feats_ref, target_ref, out_ref,
                                    *, alpha, xi):
    out_ref[...] = _per_sample_loss(logits_ref[...], feats_ref[...], target_ref[...],
                                    alpha, xi)


def objectosphere_loss(logits, features, target, *, alpha=1.0, xi=1.0,
                       reduction="mean", _max_tile_rows=None):
    """logits: [N, C] float, features: [N, D] float, target: [N] int."""
    n, c = logits.shape
    n2, d = features.shape
    assert n == n2, "logits and features must share the batch dimension"
    target2d = target.astype(jnp.int32).reshape(n, 1)

    vmem_limit = _vmem_limit_bytes()
    tile_n = _choose_tile_n(n, c, d, logits.dtype, features.dtype, vmem_limit // 2)
    if _max_tile_rows is not None:           # test hook: force a multi-block grid
        tile_n = max(8, min(tile_n, int(_max_tile_rows)))
    n_blocks = pl.cdiv(n, tile_n)

    if reduction in ("mean", "sum"):
        blocks_per_core = pl.cdiv(n_blocks, 2)
        grid = (2, blocks_per_core)

        def in_idx(ci, bi):
            # Clamp phantom tail blocks into range; their rows are masked out
            # in-kernel via the logical (unclamped) row index.
            blk = jnp.minimum(ci * blocks_per_core + bi, n_blocks - 1)
            return (blk, 0)

        kernel = functools.partial(
            _objectosphere_fused_kernel,
            alpha=float(alpha), xi=float(xi), n_total=n, tile_n=tile_n,
            blocks_per_core=blocks_per_core)

        partials = pl.pallas_call(
            kernel,
            out_shape=jax.ShapeDtypeStruct((16, 128), jnp.float32),
            grid=grid,
            in_specs=[pl.BlockSpec((tile_n, c), in_idx),
                      pl.BlockSpec((tile_n, d), in_idx),
                      pl.BlockSpec((tile_n, 1), in_idx)],
            # One (8,128) partial block per core; resident across the inner axis.
            out_specs=pl.BlockSpec((8, 128), lambda ci, bi: (ci, 0)),
            scratch_shapes=[pltpu.VMEM((tile_n, 1), jnp.float32)],
            compiler_params=pltpu.CompilerParams(
                dimension_semantics=("parallel", "arbitrary"),
                vmem_limit_bytes=vmem_limit),
        )(logits, features, target2d)
        total = partials[0, 0] + partials[8, 0]
        return total / n if reduction == "mean" else total

    if reduction is None or reduction == "none":
        kernel = functools.partial(
            _objectosphere_persample_kernel, alpha=float(alpha), xi=float(xi))
        per_sample = pl.pallas_call(
            kernel,
            out_shape=jax.ShapeDtypeStruct((n, 1), jnp.float32),
            grid=(n_blocks,),
            in_specs=[pl.BlockSpec((tile_n, c), lambda i: (i, 0)),
                      pl.BlockSpec((tile_n, d), lambda i: (i, 0)),
                      pl.BlockSpec((tile_n, 1), lambda i: (i, 0))],
            out_specs=pl.BlockSpec((tile_n, 1), lambda i: (i, 0)),
            compiler_params=pltpu.CompilerParams(
                dimension_semantics=("parallel",),
                vmem_limit_bytes=vmem_limit),
        )(logits, features, target2d)
        return per_sample.reshape(n)

    raise ValueError(f"unknown reduction: {reduction}")


def _reference(logits, features, target, alpha=1.0, xi=1.0, reduction="mean"):
    # pure-JAX reference for sanity checking
    log_probs = jax.nn.log_softmax(logits.astype(jnp.float32), axis=1)
    known = target >= 0
    ce = -jnp.take_along_axis(
        log_probs, jnp.maximum(target, 0).astype(jnp.int32)[:, None], axis=1)[:, 0]
    ent_unknown = -jnp.mean(log_probs, axis=1)
    entropic = jnp.where(known, ce, ent_unknown)
    norm = jnp.linalg.norm(features.astype(jnp.float32), axis=1)
    reg = jnp.where(known, jnp.square(jnp.maximum(xi - norm, 0.0)), norm ** 2)
    loss = entropic + alpha * reg
    if reduction == "mean":
        return jnp.mean(loss)
    if reduction == "sum":
        return jnp.sum(loss)
    return loss


if __name__ == "__main__":
    key = jax.random.PRNGKey(0)
    keys = jax.random.split(key, 8)

    # Case 1: small batch, 'mean' reduction (module defaults).
    N, C, D = 8, 16, 32
    logits = jax.random.normal(keys[0], (N, C), dtype=jnp.float32)
    features = jax.random.normal(keys[1], (N, D), dtype=jnp.float32)
    target = jnp.array([0, 3, -1, 7, -1, 2, 15, -1], dtype=jnp.int32)

    out1 = jax.block_until_ready(objectosphere_loss(logits, features, target))
    ref1 = _reference(logits, features, target)
    assert jnp.allclose(out1, ref1, rtol=1e-5, atol=1e-5), (out1, ref1)

    # Case 2: batch not a multiple of the sublane tile, 'sum' reduction.
    N2 = 13
    logits2 = jax.random.normal(keys[2], (N2, C), dtype=jnp.float32)
    features2 = jax.random.normal(keys[3], (N2, D), dtype=jnp.float32)
    target2 = jnp.array([0, -1, 3, 5, -1, 7, 2, -1, 9, 11, -1, 1, 4], dtype=jnp.int32)

    out2 = jax.block_until_ready(
        objectosphere_loss(logits2, features2, target2, alpha=0.5, xi=1.5, reduction="sum"))
    ref2 = _reference(logits2, features2, target2, alpha=0.5, xi=1.5, reduction="sum")
    assert jnp.allclose(out2, ref2, rtol=1e-5, atol=1e-5), (out2, ref2)

    # Case 3: per-sample output (reduction=None).
    out3 = jax.block_until_ready(objectosphere_loss(logits, features, target, reduction=None))
    ref3 = _reference(logits, features, target, reduction=None)
    assert jnp.allclose(out3, ref3, rtol=1e-5, atol=1e-5), (out3, ref3)

    # Case 4: forced tiny tile -> multi-block grid, exercises the dual-core
    # accumulator split, phantom-block clamping, and tail-row masking.
    N4 = 50
    logits4 = jax.random.normal(keys[4], (N4, C), dtype=jnp.float32)
    features4 = jax.random.normal(keys[5], (N4, D), dtype=jnp.float32)
    target4 = jnp.where(jax.random.uniform(keys[6], (N4,)) < 0.3, -1,
                        jax.random.randint(keys[7], (N4,), 0, C)).astype(jnp.int32)

    out4 = jax.block_until_ready(
        objectosphere_loss(logits4, features4, target4, alpha=0.7, xi=1.2,
                           reduction="mean", _max_tile_rows=8))
    ref4 = _reference(logits4, features4, target4, alpha=0.7, xi=1.2, reduction="mean")
    assert jnp.allclose(out4, ref4, rtol=1e-5, atol=1e-5), (out4, ref4)

    out5 = jax.block_until_ready(
        objectosphere_loss(logits4, features4, target4, reduction=None, _max_tile_rows=8))
    ref5 = _reference(logits4, features4, target4, reduction=None)
    assert jnp.allclose(out5, ref5, rtol=1e-5, atol=1e-5), (out5, ref5)

    # Case 6: bf16 inputs streamed natively, upcast in-vreg inside the kernel.
    out6 = jax.block_until_ready(
        objectosphere_loss(logits.astype(jnp.bfloat16), features.astype(jnp.bfloat16), target))
    ref6 = _reference(logits.astype(jnp.bfloat16), features.astype(jnp.bfloat16), target)
    assert jnp.allclose(out6, ref6, rtol=1e-4, atol=1e-4), (out6, ref6)

    print("KERNEL_OK")
</pallas_src>

<mosaic_0001>
module attributes {stable_mosaic.version = 11 : i64} {
  func.func @_objectosphere_fused_kernel(%arg0: i32, %arg1: i32, %arg2: memref<8x16xf32, #tpu.memory_space<vmem>>, %arg3: memref<8x32xf32, #tpu.memory_space<vmem>>, %arg4: memref<8x1xi32, #tpu.memory_space<vmem>>, %arg5: memref<8x128xf32, #tpu.memory_space<vmem>>, %arg6: memref<8x1xf32, #tpu.memory_space<vmem>>) attributes {dimension_semantics = [#tpu.dimension_semantics<parallel>, #tpu.dimension_semantics<arbitrary>], iteration_bounds = array<i64: 2, 1>, scalar_prefetch = 0 : i64, scratch_operands = 1 : i64, tpu.core_type = #tpu.core_type<tc>, window_params = [{transform_indices = @transform_0, window_bounds = array<i64: 8, 16>}, {transform_indices = @transform_1, window_bounds = array<i64: 8, 32>}, {transform_indices = @transform_2, window_bounds = array<i64: 8, 1>}, {transform_indices = @transform_3, window_bounds = array<i64: 8, 128>}]} {
    %c0_i32 = arith.constant 0 : i32
    %0 = arith.cmpi eq, %arg1, %c0_i32 : i32
    %1 = arith.extui %0 : i1 to i32
    %c0_i32_0 = arith.constant 0 : i32
    %2 = arith.cmpi ne, %1, %c0_i32_0 : i32
    scf.if %2 {
      %cst_24 = arith.constant 0.000000e+00 : f32
      %60 = vector.broadcast %cst_24 : f32 to vector<8x1xf32>
      %c0_25 = arith.constant 0 : index
      %c0_26 = arith.constant 0 : index
      %61 = vector.load %arg6[%c0_25, %c0_26] : memref<8x1xf32, #tpu.memory_space<vmem>>, vector<8x1xf32>
      tpu.vector_store %arg6[%c0_25, %c0_26], %60 {strides = array<i32>} : memref<8x1xf32, #tpu.memory_space<vmem>>, vector<8x1xf32>,
    } else {
    }
    %c0 = arith.constant 0 : index
    %c0_1 = arith.constant 0 : index
    %3 = vector.load %arg2[%c0, %c0_1] : memref<8x16xf32, #tpu.memory_space<vmem>>, vector<8x16xf32>
    %c0_2 = arith.constant 0 : index
    %c0_3 = arith.constant 0 : index
    %4 = vector.load %arg3[%c0_2, %c0_3] : memref<8x32xf32, #tpu.memory_space<vmem>>, vector<8x32xf32>
    %c0_4 = arith.constant 0 : index
    %c0_5 = arith.constant 0 : index
    %5 = vector.load %arg4[%c0_4, %c0_5] : memref<8x1xi32, #tpu.memory_space<vmem>>, vector<8x1xi32>
    %cst = arith.constant dense<0xFF800000> : vector<8xf32>
    %6 = vector.multi_reduction <maximumf>, %3, %cst [1] : vector<8x16xf32> to vector<8xf32>
    %7 = vector.shape_cast %6 : vector<8xf32> to vector<8x1xf32>
    %8 = vector.broadcast %7 : vector<8x1xf32> to vector<8x16xf32>
    %9 = arith.subf %3, %8 : vector<8x16xf32>
    %10 = math.exp %9 : vector<8x16xf32>
    %cst_6 = arith.constant dense<0.000000e+00> : vector<8xf32>
    %11 = vector.multi_reduction <add>, %10, %cst_6 [1] : vector<8x16xf32> to vector<8xf32>
    %12 = vector.shape_cast %11 : vector<8xf32> to vector<8x1xf32>
    %13 = math.log %12 : vector<8x1xf32>
    %14 = arith.addf %13, %7 : vector<8x1xf32>
    %15 = tpu.iota {dimensions = array<i32: 1>} : vector<8x16xi32>
    %16 = vector.broadcast %5 : vector<8x1xi32> to vector<8x16xi32>
    %17 = arith.cmpi eq, %15, %16 : vector<8x16xi32>
    %cst_7 = arith.constant 0.000000e+00 : f32
    %18 = vector.broadcast %cst_7 : f32 to vector<8x16xf32>
    %19 = arith.select %17, %3, %18 : vector<8x16xi1>, vector<8x16xf32>
    %cst_8 = arith.constant dense<0.000000e+00> : vector<8xf32>
    %20 = vector.multi_reduction <add>, %19, %cst_8 [1] : vector<8x16xf32> to vector<8xf32>
    %21 = vector.shape_cast %20 : vector<8xf32> to vector<8x1xf32>
    %cst_9 = arith.constant dense<0.000000e+00> : vector<8xf32>
    %22 = vector.multi_reduction <add>, %3, %cst_9 [1] : vector<8x16xf32> to vector<8xf32>
    %23 = vector.shape_cast %22 : vector<8xf32> to vector<8x1xf32>
    %cst_10 = arith.constant 6.250000e-02 : f32
    %24 = vector.broadcast %cst_10 : f32 to vector<8x1xf32>
    %25 = arith.mulf %23, %24 : vector<8x1xf32>
    %c0_i32_11 = arith.constant 0 : i32
    %26 = vector.broadcast %c0_i32_11 : i32 to vector<8x1xi32>
    %27 = arith.cmpi sge, %5, %26 : vector<8x1xi32>
    %28 = arith.subf %14, %21 : vector<8x1xf32>
    %29 = arith.subf %14, %25 : vector<8x1xf32>
    %30 = arith.select %27, %28, %29 : vector<8x1xi1>, vector<8x1xf32>
    %31 = arith.mulf %4, %4 : vector<8x32xf32>
    %cst_12 = arith.constant dense<0.000000e+00> : vector<8xf32>
    %32 = vector.multi_reduction <add>, %31, %cst_12 [1] : vector<8x32xf32> to vector<8xf32>
    %33 = vector.shape_cast %32 : vector<8xf32> to vector<8x1xf32>
    %34 = math.sqrt %33 : vector<8x1xf32>
    %cst_13 = arith.constant 1.000000e+00 : f32
    %35 = vector.broadcast %cst_13 : f32 to vector<8x1xf32>
    %36 = arith.subf %35, %34 : vector<8x1xf32>
    %cst_14 = arith.constant 0.000000e+00 : f32
    %37 = vector.broadcast %cst_14 : f32 to vector<8x1xf32>
    %38 = arith.maximumf %36, %37 : vector<8x1xf32>
    %39 = arith.mulf %38, %38 : vector<8x1xf32>
    %40 = arith.select %27, %39, %33 : vector<8x1xi1>, vector<8x1xf32>
    %cst_15 = arith.constant 1.000000e+00 : f32
    %41 = vector.broadcast %cst_15 : f32 to vector<8x1xf32>
    %42 = arith.mulf %41, %40 : vector<8x1xf32>
    %43 = arith.addf %30, %42 : vector<8x1xf32>
    %c1_i32 = arith.constant 1 : i32
    %44 = arith.muli %arg0, %c1_i32 : i32
    %45 = arith.addi %44, %arg1 : i32
    %c8_i32 = arith.constant 8 : i32
    %46 = arith.muli %45, %c8_i32 : i32
    %47 = tpu.iota {dimensions = array<i32: 0>} : vector<8x1xi32>
    %48 = vector.broadcast %46 : i32 to vector<8x1xi32>
    %49 = arith.addi %48, %47 : vector<8x1xi32>
    %c8_i32_16 = arith.constant 8 : i32
    %50 = vector.broadcast %c8_i32_16 : i32 to vector<8x1xi32>
    %51 = arith.cmpi slt, %49, %50 : vector<8x1xi32>
    %cst_17 = arith.constant 0.000000e+00 : f32
    %52 = vector.broadcast %cst_17 : f32 to vector<8x1xf32>
    %53 = arith.select %51, %43, %52 : vector<8x1xi1>, vector<8x1xf32>
    %c0_18 = arith.constant 0 : index
    %c0_19 = arith.constant 0 : index
    %54 = vector.load %arg6[%c0_18, %c0_19] : memref<8x1xf32, #tpu.memory_space<vmem>>, vector<8x1xf32>
    %55 = arith.addf %54, %53 : vector<8x1xf32>
    %c0_20 = arith.constant 0 : index
    %c0_21 = arith.constant 0 : index
    %56 = vector.load %arg6[%c0_20, %c0_21] : memref<8x1xf32, #tpu.memory_space<vmem>>, vector<8x1xf32>
    tpu.vector_store %arg6[%c0_20, %c0_21], %55 {strides = array<i32>} : memref<8x1xf32, #tpu.memory_space<vmem>>, vector<8x1xf32>,
    %c0_i32_22 = arith.constant 0 : i32
    %57 = arith.cmpi eq, %arg1, %c0_i32_22 : i32
    %58 = arith.extui %57 : i1 to i32
    %c0_i32_23 = arith.constant 0 : i32
    %59 = arith.cmpi ne, %58, %c0_i32_23 : i32
    scf.if %59 {
      %c0_24 = arith.constant 0 : index
      %c0_25 = arith.constant 0 : index
      %60 = vector.load %arg6[%c0_24, %c0_25] : memref<8x1xf32, #tpu.memory_space<vmem>>, vector<8x1xf32>
      %cst_26 = arith.constant dense<0.000000e+00> : vector<1xf32>
      %61 = vector.multi_reduction <add>, %60, %cst_26 [0] : vector<8x1xf32> to vector<1xf32>
      %62 = vector.shape_cast %61 : vector<1xf32> to vector<1x1xf32>
      %63 = vector.shape_cast %62 : vector<1x1xf32> to vector<1x1xf32>
      %64 = vector.broadcast %63 : vector<1x1xf32> to vector<8x128xf32>
      %c0_27 = arith.constant 0 : index
      %c0_28 = arith.constant 0 : index
      %65 = vector.load %arg5[%c0_27, %c0_28] : memref<8x128xf32, #tpu.memory_space<vmem>>, vector<8x128xf32>
      tpu.vector_store %arg5[%c0_27, %c0_28], %64 {strides = array<i32>} : memref<8x128xf32, #tpu.memory_space<vmem>>, vector<8x128xf32>,
    } else {
    }
    return
  }
  func.func @transform_0(%arg0: i32, %arg1: i32) -> (i32, i32) {
    %c1_i32 = arith.constant 1 : i32
    %0 = arith.muli %arg0, %c1_i32 : i32
    %1 = arith.addi %0, %arg1 : i32
    %c0_i32 = arith.constant 0 : i32
    %2 = arith.minsi %1, %c0_i32 : i32
    %c0_i32_0 = arith.constant 0 : i32
    %c0_i32_1 = arith.constant 0 : i32
    return %2, %c0_i32_0 : i32, i32
  }
  func.func @transform_1(%arg0: i32, %arg1: i32) -> (i32, i32) {
    %c1_i32 = arith.constant 1 : i32
    %0 = arith.muli %arg0, %c1_i32 : i32
    %1 = arith.addi %0, %arg1 : i32
    %c0_i32 = arith.constant 0 : i32
    %2 = arith.minsi %1, %c0_i32 : i32
    %c0_i32_0 = arith.constant 0 : i32
    %c0_i32_1 = arith.constant 0 : i32
    return %2, %c0_i32_0 : i32, i32
  }
  func.func @transform_2(%arg0: i32, %arg1: i32) -> (i32, i32) {
    %c1_i32 = arith.constant 1 : i32
    %0 = arith.muli %arg0, %c1_i32 : i32
    %1 = arith.addi %0, %arg1 : i32
    %c0_i32 = arith.constant 0 : i32
    %2 = arith.minsi %1, %c0_i32 : i32
    %c0_i32_0 = arith.constant 0 : i32
    %c0_i32_1 = arith.constant 0 : i32
    return %2, %c0_i32_0 : i32, i32
  }
  func.func @transform_3(%arg0: i32, %arg1: i32) -> (i32, i32) {
    %c0_i32 = arith.constant 0 : i32
    %c0_i32_0 = arith.constant 0 : i32
    return %arg0, %c0_i32 : i32, i32
  }
}

</mosaic_0001>

<llo_original>
// kernel: tpu_custom_call.1
$region0: #{tpu_custom_call.1}
  #allocation0 [shape = 'u32[]', space=smem, size = 0x4, offset = 0x4, fixed_abs, tag = 'smem constant byte address 0x4 - core index']
  #allocation1 [shape = 'u32[144,128]{1,0:T(1,128)}', space=vmem, size = 0x12000, scoped, tag = 'internal scratch']
  #allocation2 [shape = 'f32[8,1]{1,0:T(8,128)}', space=vmem, size = 0x1000, scoped, tag = 'scratch operand']
  %s0 = inlined_call_operand.vmem [shape: f32[8,16], index: 0, kind: input, shape index: {}]
  %s1 = inlined_call_operand.hbm [shape: f32[8,32], index: 1, kind: input, shape index: {}]
  %s2 = inlined_call_operand.vmem [shape: s32[8,1], index: 2, kind: input, shape index: {}]
  %s3 = inlined_call_operand.hbm [shape: f32[16,128], index: 3, kind: output, shape index: {}]
  %s4 = sld [smem:[#allocation0]]
  $region57: #{tpu_custom_call.1} parent=0
    _
  %s6 = ssub.s32 1, %s4
  %s7 = scalar_select 0, %s6, %s4
  $region1: #{tpu_custom_call.1} parent=0
    #allocation3 [shape = 'u8[8192]{0}', space=vmem, size = 0x2000, scoped, tag = 'input window, operand 1']
    #allocation4 [shape = 's32[2]{0}', space=sflag, size = 0x8, scoped, tag = 'scoped memory for tpu_custom_call.1']
    #allocation5 [shape = 's32[2]{0}', space=sflag, size = 0x8, scoped, tag = 'scoped memory for tpu_custom_call.1']
    #allocation6 [shape = 'u8[8192]{0}', space=vmem, size = 0x2000, scoped, tag = 'output window, operand 0']
    %8 = vsyncpa [#allocation4], 0
    %s9 = scalar_lea.sflag [#allocation4], 1
    %10 = vsyncpa %s9, 0
    %11 = vsyncpa [#allocation5], 0
    %s12 = scalar_lea.sflag [#allocation5], 1
    %13 = vsyncpa %s12, 0
    loop: start=0, step=1, limit=4
    $region2: #{tpu_custom_call.1} parent=1 // loop_pre_header
      _
    $region3: #{tpu_custom_call.1} parent=1 // loop_header
      %s15 = sphi 0, %s19
      %p16 = scmp.ge.s32.totalorder %s15, 4
      %s22 = sphi 0, %s34
      %s23 = sphi 0, %s30
      %s24 = sphi 0, %s22
      %s25 = sphi 0, %s23
      %s26 = sphi 0, %s24
      %s27 = sphi 0, %s25
      %s43 = sphi 0, %s45
      %s46 = sphi 0, %s43
      %s47 = sphi 0, %s46
      %s63 = sphi 0, %s47
      %s75 = sphi 0, %s77
      %s78 = sphi 0, %s75
      %s79 = sphi 0, %s78
      %s95 = sphi 0, %s79
      %s107 = sphi 0, %s109
      %s110 = sphi 0, %s107
      %s111 = sphi 0, %s110
      %s127 = sphi 0, %s111
      %s133 = sphi 0, %s135
      %s136 = sphi 0, %s133
      %s137 = sphi 0, %s136
      %s153 = sphi 0, %s137
    $region4: #{tpu_custom_call.1} parent=1 // loop_header_branch
      %18 = sbr.rel (%p16) target = $region8
    $region5: #{tpu_custom_call.1} parent=1 // loop_body
      %s20 = ssub.s32 %s15, 1
      %s21 = ssub.s32 %s15, 2
      %s28 = sadd.s32 1, %s23
      %p29 = scmp.ge.s32.totalorder %s28, 1
      %s30 = scalar_select %p29, 0, %s28
      %s31 = sadd.s32 1, %s22
      %s32 = scalar_select %p29, %s31, %s22
      %p33 = scmp.ge.s32.totalorder %s32, 2
      %s34 = scalar_select %p33, 0, %s32
      %s35 = sadd.s32 %s22, %s23
      %p36 = scmp.lt.s32.totalorder %s35, 0
      %s37 = scalar_select %p36, %s35, 0
      %s38 = sadd.s32 %s34, %s30
      %p39 = scmp.lt.s32.totalorder %s38, 0
      %s40 = scalar_select %p39, %s38, 0
      %s41 = ssub.s32 %s37, %s40
      %p42 = scmp.eq.s32.totalorder %s41, 0
      %s44 = sadd.s32 %s43, 1
      %s45 = scalar_select %p42, %s43, %s44
      %p48 = pneg %p42
      %p49 = scmp.eq.s32.totalorder %s15, 1
      %p50 = por %p48, %p49
      %p51 = scmp.ne.s32.totalorder %s43, %s46
      %p52 = scmp.eq.s32.totalorder %s15, 0
      %p53 = por %p51, %p52
      %p54 = scmp.ne.s32.totalorder %s43, %s46
      %p55 = scmp.eq.s32.totalorder %s20, 1
      %p56 = por %p54, %p55
      %p57 = scmp.ne.s32.totalorder %s46, %s47
      %p58 = scmp.eq.s32.totalorder %s20, 0
      %p59 = por %p57, %p58
      %p60 = scmp.ne.s32.totalorder %s46, %s47
      %p61 = scmp.eq.s32.totalorder %s21, 1
      %p62 = por %p60, %p61
      %p64 = scmp.ne.s32.totalorder %s47, %s63
      %p65 = scmp.eq.s32.totalorder %s21, 0
      %p66 = por %p64, %p65
      %s67 = sadd.s32 %s22, %s23
      %p68 = scmp.lt.s32.totalorder %s67, 0
      %s69 = scalar_select %p68, %s67, 0
      %s70 = sadd.s32 %s34, %s30
      %p71 = scmp.lt.s32.totalorder %s70, 0
      %s72 = scalar_select %p71, %s70, 0
      %s73 = ssub.s32 %s69, %s72
      %p74 = scmp.eq.s32.totalorder %s73, 0
      %s76 = sadd.s32 %s75, 1
      %s77 = scalar_select %p74, %s75, %s76
      %p80 = pneg %p74
      %p81 = scmp.eq.s32.totalorder %s15, 1
      %p82 = por %p80, %p81
      %p83 = scmp.ne.s32.totalorder %s75, %s78
      %p84 = scmp.eq.s32.totalorder %s15, 0
      %p85 = por %p83, %p84
      %p86 = scmp.ne.s32.totalorder %s75, %s78
      %p87 = scmp.eq.s32.totalorder %s20, 1
      %p88 = por %p86, %p87
      %p89 = scmp.ne.s32.totalorder %s78, %s79
      %p90 = scmp.eq.s32.totalorder %s20, 0
      %p91 = por %p89, %p90
      %p92 = scmp.ne.s32.totalorder %s78, %s79
      %p93 = scmp.eq.s32.totalorder %s21, 1
      %p94 = por %p92, %p93
      %p96 = scmp.ne.s32.totalorder %s79, %s95
      %p97 = scmp.eq.s32.totalorder %s21, 0
      %p98 = por %p96, %p97
      %s99 = sadd.s32 %s22, %s23
      %p100 = scmp.lt.s32.totalorder %s99, 0
      %s101 = scalar_select %p100, %s99, 0
      %s102 = sadd.s32 %s34, %s30
      %p103 = scmp.lt.s32.totalorder %s102, 0
      %s104 = scalar_select %p103, %s102, 0
      %s105 = ssub.s32 %s101, %s104
      %p106 = scmp.eq.s32.totalorder %s105, 0
      %s108 = sadd.s32 %s107, 1
      %s109 = scalar_select %p106, %s107, %s108
      %p112 = pneg %p106
      %p113 = scmp.eq.s32.totalorder %s15, 1
      %p114 = por %p112, %p113
      %p115 = scmp.ne.s32.totalorder %s107, %s110
      %p116 = scmp.eq.s32.totalorder %s15, 0
      %p117 = por %p115, %p116
      %p118 = scmp.ne.s32.totalorder %s107, %s110
      %p119 = scmp.eq.s32.totalorder %s20, 1
      %p120 = por %p118, %p119
      %p121 = scmp.ne.s32.totalorder %s110, %s111
      %p122 = scmp.eq.s32.totalorder %s20, 0
      %p123 = por %p121, %p122
      %p124 = scmp.ne.s32.totalorder %s110, %s111
      %p125 = scmp.eq.s32.totalorder %s21, 1
      %p126 = por %p124, %p125
      %p128 = scmp.ne.s32.totalorder %s111, %s127
      %p129 = scmp.eq.s32.totalorder %s21, 0
      %p130 = por %p128, %p129
      %s131 = ssub.s32 %s22, %s34
      %p132 = scmp.eq.s32.totalorder %s131, 0
      %s134 = sadd.s32 %s133, 1
      %s135 = scalar_select %p132, %s133, %s134
      %p138 = pneg %p132
      %p139 = scmp.eq.s32.totalorder %s15, 1
      %p140 = por %p138, %p139
      %p141 = scmp.ne.s32.totalorder %s133, %s136
      %p142 = scmp.eq.s32.totalorder %s15, 0
      %p143 = por %p141, %p142
      %p144 = scmp.ne.s32.totalorder %s133, %s136
      %p145 = scmp.eq.s32.totalorder %s20, 1
      %p146 = por %p144, %p145
      %p147 = scmp.ne.s32.totalorder %s136, %s137
      %p148 = scmp.eq.s32.totalorder %s20, 0
      %p149 = por %p147, %p148
      %p150 = scmp.ne.s32.totalorder %s136, %s137
      %p151 = scmp.eq.s32.totalorder %s21, 1
      %p152 = por %p150, %p151
      %p154 = scmp.ne.s32.totalorder %s137, %s153
      %p155 = scmp.eq.s32.totalorder %s21, 0
      %p156 = por %p154, %p155
      %p157 = scmp.le.s32.totalorder 1, %s15
      %p158 = scmp.lt.s32.totalorder %s15, 3
      %p159 = pnand %p157, %p158
      %p160 = pneg %p159
      // Predicated region
      $region9: #{tpu_custom_call.1} parent=5 // pred_check
        _
      $region10: #{tpu_custom_call.1} parent=5 // pred_check_branch
        %162 = sbr.rel (%p159) target = $region12
      $region11: #{tpu_custom_call.1} parent=5 // pred_region
        %s163 = ssub.s32 %s15, 1
      $region12: #{tpu_custom_call.1} parent=5 // pred_fallthru
        _
      %p164 = scmp.lt.s32.totalorder %s15, 2
      // Predicated region
      $region13: #{tpu_custom_call.1} parent=5 // pred_check
        %p165 = pneg %p164
      $region14: #{tpu_custom_call.1} parent=5 // pred_check_branch
        %167 = sbr.rel (%p165) target = $region16
      $region15: #{tpu_custom_call.1} parent=5 // pred_region
        // Predicated region
        $region17: #{tpu_custom_call.1} parent=15 // pred_check
          %p168 = pneg %p53
        $region18: #{tpu_custom_call.1} parent=15 // pred_check_branch
          %170 = sbr.rel (%p168) target = $region20
        $region19: #{tpu_custom_call.1} parent=15 // pred_region
          %s171 = sadd.s32 %s22, %s23
          %p172 = scmp.lt.s32.totalorder %s171, 0
          %s173 = scalar_select %p172, %s171, 0
          %p174 = scmp.lt.s32.totalorder %s173, 0
          %s175 = scalar_select %p174, %s173, 0
          %s176 = smul.addr %s175, 8
          %s177 = scalar_lea.vmem %s0, %s176
          %s178 = sadd.s32 %s22, %s23
          %p179 = scmp.lt.s32.totalorder %s178, 0
          %s180 = scalar_select %p179, %s178, 0
        $region20: #{tpu_custom_call.1} parent=15 // pred_fallthru
          _
        // Predicated region
        $region21: #{tpu_custom_call.1} parent=15 // pred_check
          %p181 = pneg %p85
        $region22: #{tpu_custom_call.1} parent=15 // pred_check_branch
          %183 = sbr.rel (%p181) target = $region24
        $region23: #{tpu_custom_call.1} parent=15 // pred_region
          %s184 = sand.u32 %s75, 1
          %s185 = scalar_lea.sflag [#allocation4], %s184
          %s186 = sand.u32 %s75, 1
          %s187 = smul.addr %s186, 8
          %s188 = scalar_lea.vmem [#allocation3], %s187
          %s189 = sadd.s32 %s22, %s23
          %p190 = scmp.lt.s32.totalorder %s189, 0
          %s191 = scalar_select %p190, %s189, 0
          %s193 = ssub.s32 128, 128
          %194 = vsyncadd %s185, %s193
          %s195 = smul.addr %s191, 128
          %s196 = scalar_lea.hbm %s1, %s195
          %s198 = sshll.u32 %s188, 4
          %s199 = int_to_ptr.vmem [resolvable:$true] %s198
          %201 = dma.hbm_to_vmem [thread:$0]  %s196, 128, %s199, %s185
        $region24: #{tpu_custom_call.1} parent=15 // pred_fallthru
          _
        // Predicated region
        $region25: #{tpu_custom_call.1} parent=15 // pred_check
          %p202 = pneg %p117
        $region26: #{tpu_custom_call.1} parent=15 // pred_check_branch
          %204 = sbr.rel (%p202) target = $region28
        $region27: #{tpu_custom_call.1} parent=15 // pred_region
          %s205 = sadd.s32 %s22, %s23
          %p206 = scmp.lt.s32.totalorder %s205, 0
          %s207 = scalar_select %p206, %s205, 0
          %p208 = scmp.lt.s32.totalorder %s207, 0
          %s209 = scalar_select %p208, %s207, 0
          %s210 = smul.addr %s209, 8
          %s211 = scalar_lea.vmem %s2, %s210
          %s212 = sadd.s32 %s22, %s23
          %p213 = scmp.lt.s32.totalorder %s212, 0
          %s214 = scalar_select %p213, %s212, 0
        $region28: #{tpu_custom_call.1} parent=15 // pred_fallthru
          _
      $region16: #{tpu_custom_call.1} parent=5 // pred_fallthru
        _
      %p215 = scmp.le.s32.totalorder 1, %s15
      %p216 = scmp.lt.s32.totalorder %s15, 3
      %p217 = pnand %p215, %p216
      %p218 = pneg %p217
      // Predicated region
      $region29: #{tpu_custom_call.1} parent=5 // pred_check
        _
      $region30: #{tpu_custom_call.1} parent=5 // pred_check_branch
        %220 = sbr.rel (%p217) target = $region32
      $region31: #{tpu_custom_call.1} parent=5 // pred_region
        %s221 = ssub.s32 %s15, 1
        %s222 = sand.u32 %s78, 1
        %s223 = scalar_lea.sflag [#allocation4], %s222
        %s224 = sand.u32 %s78, 1
        %s225 = smul.addr %s224, 8
        %s226 = scalar_lea.vmem [#allocation3], %s225
        // Predicated region
        $region33: #{tpu_custom_call.1} parent=31 // pred_check
          %p227 = pneg %p91
        $region34: #{tpu_custom_call.1} parent=31 // pred_check_branch
          %229 = sbr.rel (%p227) target = $region36
        $region35: #{tpu_custom_call.1} parent=31 // pred_region
          %230 = dma.done %s223, 128
        $region36: #{tpu_custom_call.1} parent=31 // pred_fallthru
          _
        %s231 = sadd.s32 %s24, %s25
        %p232 = scmp.lt.s32.totalorder %s231, 0
        %s233 = scalar_select %p232, %s231, 0
        %p234 = scmp.lt.s32.totalorder %s233, 0
        %s235 = scalar_select %p234, %s233, 0
        %s236 = smul.addr %s235, 8
        %s237 = scalar_lea.vmem %s0, %s236
        %p238 = pneg %p59
        %p239 = pneg %p56
        %s240 = sand.u32 %s78, 1
        %s241 = scalar_lea.sflag [#allocation4], %s240
        %s242 = sand.u32 %s78, 1
        %s243 = smul.addr %s242, 8
        %s244 = scalar_lea.vmem [#allocation3], %s243
        %p245 = pneg %p91
        %p246 = pneg %p88
        %s247 = sadd.s32 %s24, %s25
        %p248 = scmp.lt.s32.totalorder %s247, 0
        %s249 = scalar_select %p248, %s247, 0
        %p250 = scmp.lt.s32.totalorder %s249, 0
        %s251 = scalar_select %p250, %s249, 0
        %s252 = smul.addr %s251, 8
        %s253 = scalar_lea.vmem %s2, %s252
        %p254 = pneg %p123
        %p255 = pneg %p120
        %p256 = pneg %p149
        %p257 = pneg %p146
        %s258 = sand.u32 %s136, 1
        %s259 = scalar_lea.sflag [#allocation5], %s258
        %s260 = sand.u32 %s136, 1
        %s261 = smul.addr %s260, 8
        %s262 = scalar_lea.vmem [#allocation6], %s261
        %s263 = sadd.s32 %s24, %s25
        %p264 = scmp.lt.s32.totalorder %s263, 0
        %s265 = scalar_select %p264, %s263, 0
        %p266 = scmp.lt.s32.totalorder %s265, 0
        %s267 = scalar_select %p266, %s265, 0
        %s268 = smul.addr %s267, 8
        %s269 = scalar_lea.vmem %s0, %s268
        %s270 = sadd.s32 %s24, %s25
        %p271 = scmp.lt.s32.totalorder %s270, 0
        %s272 = scalar_select %p271, %s270, 0
        %s273 = sadd.s32 %s24, %s25
        %p274 = scmp.lt.s32.totalorder %s273, 0
        %s275 = scalar_select %p274, %s273, 0
        %s276 = sadd.s32 %s24, %s25
        %p277 = scmp.lt.s32.totalorder %s276, 0
        %s278 = scalar_select %p277, %s276, 0
        %p279 = scmp.lt.s32.totalorder %s278, 0
        %s280 = scalar_select %p279, %s278, 0
        %s281 = smul.addr %s280, 8
        %s282 = scalar_lea.vmem %s2, %s281
        %s283 = sadd.s32 %s24, %s25
        %p284 = scmp.lt.s32.totalorder %s283, 0
        %s285 = scalar_select %p284, %s283, 0
        %p286 = scmp.eq.s32.totalorder %s25, 0
        // Predicated region
        $region37: #{tpu_custom_call.1} parent=31 // pred_check
          %p287 = pneg %p286
        $region38: #{tpu_custom_call.1} parent=31 // pred_check_branch
          %289 = sbr.rel (%p287) target = $region40
        $region39: #{tpu_custom_call.1} parent=31 // pred_region
          %vm290 = vcmask 7168
          %291 = vst.msk [vmem:[#allocation2] sm:$0xff] %vm290, 0.0
        $region40: #{tpu_custom_call.1} parent=31 // pred_fallthru
          _
        %v292 = vld [vmem:[%s269] sm:$0xff]
        %v293 = vld [vmem:[%s226] sm:$0xff]
        %v294 = vld [vmem:[%s282] sm:$0xff]
        %vm295 = vcmask 130048
        %v296 = vsel %vm295, %v292, -inf
        %297 = vmax.xlane.f32.xlu0 %v296
        %v298 = vpop.xlane.xlu0 %297
        %v299 = vsub.f32 %v292, %v298
        %v300 = vmul.f32 %v299, 1.442695
        %v301 = vpow.pop %v300
        %v302 = vsel %vm295, %v301, 0.0
        %303 = vadd.xlane.f32.xlu0 %v302
        %v304 = vpop.xlane.xlu0 %303
        %v305 = vlog2.pop %v304
        %v306 = vmul.f32 %v305, 0.6931472
        %v307 = vadd.f32 %v306, %v298
        %v308 = vlaneseq
        %v309 = vand.u32 %v308, 127
        %310 = vset.pattern.permute.xlu0 0
        %311 = vperm.xlu0 %310, %v294
        %v312 = vpop.permute.xlu0 %311
        %vm313 = vcmp.eq.s32.totalorder %v309, %v312
        %v314 = vsel %vm313, %v292, 0.0
        %v315 = vsel %vm295, %v314, 0.0
        %316 = vadd.xlane.f32.xlu0 %v315
        %v317 = vpop.xlane.xlu0 %316
        %v318 = vsel %vm295, %v292, 0.0
        %319 = vadd.xlane.f32.xlu0 %v318
        %v320 = vpop.xlane.xlu0 %319
        %v321 = vmul.f32 %v320, 0.0625
        %vm322 = vcmp.ge.s32.totalorder %v294, 0
        %v323 = vsub.f32 %v307, %v317
        %v324 = vsub.f32 %v307, %v321
        %v325 = vsel %vm322, %v323, %v324
        %v326 = vmul.f32 %v293, %v293
        %vm327 = vcmask 261120
        %v328 = vsel %vm327, %v326, 0.0
        %329 = vadd.xlane.f32.xlu0 %v328
        %v330 = vpop.xlane.xlu0 %329
        %v331 = vrsqrt.pop %v330
        %v332 = vmul.f32 %v330, %v331
        %vm333 = vcmp.eq.f32.partialorder %v330, inf
        %v334 = vsel %vm333, %v330, %v332
        %vm335 = vcmp.eq.f32.partialorder %v330, 0.0
        %v336 = vand.u32 %v330, 2147483648
        %v337 = vsel %vm335, %v336, %v334
        %v338 = vsub.f32 1.0, %v337
        %v339 = vmax.f32 %v338, 0.0
        %v340 = vmul.f32 %v339, %v339
        %v341 = vsel %vm322, %v340, %v330
        %v342 = vadd.f32 %v325, %v341
        %s343 = sadd.s32 %s24, %s25
        %s344 = smul.u32 %s343, 8
        %v345 = vlaneseq
        %v346 = vshrl.u32 %v345, 7
        %v347 = vstv %s344
        %v348 = vadd.s32 %v347, %v346
        %vm349 = vcmp.lt.s32.totalorder %v348, 8
        %v350 = vsel %vm349, %v342, 0.0
        %v351 = vld [vmem:[#allocation2] sm:$0xff]
        %v352 = vadd.f32 %v351, %v350
        %vm353 = vcmask 7168
        %354 = vst.msk [vmem:[#allocation2] sm:$0xff] %vm353, %v352
        // Predicated region
        $region41: #{tpu_custom_call.1} parent=31 // pred_check
          %p355 = pneg %p286
        $region42: #{tpu_custom_call.1} parent=31 // pred_check_branch
          %357 = sbr.rel (%p355) target = $region44
        $region43: #{tpu_custom_call.1} parent=31 // pred_region
          %v358 = vld [vmem:[#allocation2] sm:$0xff]
          %v359 = vsel %vm353, %v358, 0.0
          %v360 = vrot.slane %v359, 4
          %v361 = vadd.f32 %v359, %v360
          %v362 = vrot.slane %v361, 2
          %v363 = vadd.f32 %v361, %v362
          %v364 = vrot.slane %v363, 1
          %v365 = vadd.f32 %v363, %v364
          %367 = vset.pattern.permute.xlu0 0
          %368 = vperm.xlu0 %367, %v365
          %v369 = vpop.permute.xlu0 %368
          %371 = vst [vmem:[%s262] sm:$0xff] %v369
        $region44: #{tpu_custom_call.1} parent=31 // pred_fallthru
          _
        %s372 = sand.u32 %s136, 1
        %s373 = scalar_lea.sflag [#allocation5], %s372
        %s374 = sand.u32 %s136, 1
        %s375 = smul.addr %s374, 8
        %s376 = scalar_lea.vmem [#allocation6], %s375
        // Predicated region
        $region45: #{tpu_custom_call.1} parent=31 // pred_check
          %p377 = pneg %p146
        $region46: #{tpu_custom_call.1} parent=31 // pred_check_branch
          %379 = sbr.rel (%p377) target = $region48
        $region47: #{tpu_custom_call.1} parent=31 // pred_region
          %s381 = ssub.s32 128, 128
          %382 = vsyncadd %s373, %s381
          %s383 = smul.addr %s24, 128
          %s384 = scalar_lea.hbm %s3, %s383
          %s386 = sshll.u32 %s376, 4
          %s387 = int_to_ptr.vmem [resolvable:$true] %s386
          %389 = dma.vmem_to_hbm [thread:$0]  %s387, 128, %s384, %s373
        $region48: #{tpu_custom_call.1} parent=31 // pred_fallthru
          _
      $region32: #{tpu_custom_call.1} parent=5 // pred_fallthru
        _
      %p390 = scmp.le.s32.totalorder 2, %s15
      // Predicated region
      $region49: #{tpu_custom_call.1} parent=5 // pred_check
        %p391 = pneg %p390
      $region50: #{tpu_custom_call.1} parent=5 // pred_check_branch
        %393 = sbr.rel (%p391) target = $region52
      $region51: #{tpu_custom_call.1} parent=5 // pred_region
        %s394 = ssub.s32 %s15, 2
        // Predicated region
        $region53: #{tpu_custom_call.1} parent=51 // pred_check
          %p395 = pneg %p152
        $region54: #{tpu_custom_call.1} parent=51 // pred_check_branch
          %397 = sbr.rel (%p395) target = $region56
        $region55: #{tpu_custom_call.1} parent=51 // pred_region
          %s398 = sand.u32 %s137, 1
          %s399 = scalar_lea.sflag [#allocation5], %s398
          %s400 = sand.u32 %s137, 1
          %s401 = smul.addr %s400, 8
          %s402 = scalar_lea.vmem [#allocation6], %s401
          %403 = dma.done %s399, 128
        $region56: #{tpu_custom_call.1} parent=51 // pred_fallthru
          _
      $region52: #{tpu_custom_call.1} parent=5 // pred_fallthru
        _
    $region6: #{tpu_custom_call.1} parent=1 // loop_footer
      %s19 = sadd.s32 1, %s15
    $region7: #{tpu_custom_call.1} parent=1 // loop_footer_branch
      %14 = sbr.rel target = $region3
    $region8: #{tpu_custom_call.1} parent=1 // loop_exit
      _
    %404 = vsyncpa [#allocation4], 1
    %s405 = scalar_lea.sflag [#allocation4], 1
    %406 = vsyncpa %s405, 1
    %407 = vsyncpa [#allocation5], 1
    %s408 = scalar_lea.sflag [#allocation5], 1
    %409 = vsyncpa %s408, 1

</llo_original>
